<compile_context>
chip_gen: v6e
topology: v6e:2x2x1
jax: 0.10.0
libtpu: 0.0.40
codegen_flags: <defaults>
</compile_context>

<pallas_src>
import jax
import jax.numpy as jnp
from jax.experimental import pallas as pl
from jax.experimental.pallas import tpu as pltpu

LANES = 128


def _round_up(n, m):
    return ((n + m - 1) // m) * m


def torch_model_forward(params, x, y=None, *, slab_dtype=jnp.float32, b_tile=None):
    """Mirrors TorchModel.forward.  x: (B, T) int ids.  y optional (B,) int labels.

    Returns (B, C) logits, or the scalar mean cross-entropy loss if y is given.
    """
    emb, w_ih, b_ih, w_hh, b_hh, w_c, b_c = params
    B, T = x.shape
    V, _D = emb.shape
    H = w_hh.shape[0]
    C = w_c.shape[0]

    # ---- weight-only algebra, done once in the wrapper ----------------------
    emb_ih = jnp.dot(emb, w_ih.T)                # (V, H): embedding fused with W_ih
    bias_sum = (b_ih + b_hh).reshape(H)          # merged RNN biases

    # ---- pack everything into one lane-padded slab (single DMA) -------------
    V_pad = _round_up(V, 8)
    ROW_EMB = 0
    ROW_WHH = V_pad                  # 128 rows of zero-padded W_hh^T
    ROW_WC = ROW_WHH + LANES         # 128 rows of zero-padded W_c^T
    ROW_B = ROW_WC + LANES           # merged RNN bias row
    ROW_BC = ROW_B + 8               # classifier bias row
    ROWS = ROW_BC + 8

    slab = jnp.zeros((ROWS, LANES), jnp.float32)
    slab = slab.at[ROW_EMB:ROW_EMB + V, :H].set(emb_ih)
    slab = slab.at[ROW_WHH:ROW_WHH + H, :H].set(w_hh.T)
    slab = slab.at[ROW_WC:ROW_WC + H, :C].set(w_c.T)
    slab = slab.at[ROW_B, :H].set(bias_sum)
    slab = slab.at[ROW_BC, :C].set(b_c)
    slab = slab.astype(slab_dtype)               # bf16 option for v6e/v7x MXU path

    # ---- batch tiling (grid parallel over tiles -> both v7x TensorCores) ----
    if b_tile is None:
        b_tile = min(LANES, _round_up(B, 8))
    b_tile = _round_up(b_tile, 8)
    num_tiles = pl.cdiv(B, b_tile)
    B_pad = num_tiles * b_tile

    # batch-pad with token 0 (in-vocab); padded rows are sliced away / masked out.
    x_pad = jnp.zeros((B_pad, T), jnp.int32).at[:B].set(x.astype(jnp.int32))
    # per-tile time-major flattening: row (t*b_tile + b) of tile i <- x_pad[i*b_tile + b, t]
    ids = (x_pad.reshape(num_tiles, b_tile, T)
                .transpose(0, 2, 1)
                .reshape(num_tiles * T * b_tile, 1))

    compute_loss = y is not None

    def kernel(*refs):
        if compute_loss:
            ids_ref, y_ref, slab_ref, out_ref = refs
        else:
            ids_ref, slab_ref, out_ref = refs

        # One consolidated, resident weight slab; all sections 8-row / 128-lane aligned.
        emb_ih_pad = slab_ref[ROW_EMB:ROW_EMB + V_pad, :]      # (V_pad, 128)
        w_hh_pad = slab_ref[ROW_WHH:ROW_WHH + LANES, :]        # (128, 128), zero outside [H,H]
        w_c_pad = slab_ref[ROW_WC:ROW_WC + LANES, :]           # (128, 128), zero outside [H,C]
        bias_pad = slab_ref[ROW_B:ROW_B + 1, :].astype(jnp.float32)   # (1, 128), f32 adds
        b_c_pad = slab_ref[ROW_BC:ROW_BC + 1, :].astype(jnp.float32)  # (1, 128)

        tok = ids_ref[...]                                     # (T*b_tile, 1) int32
        # iota built ONCE (JAX does not CSE broadcast_in_dim)
        iota_v = jax.lax.broadcasted_iota(jnp.int32, (T * b_tile, V_pad), 1)
        one_hot = (tok == iota_v).astype(slab_dtype)           # exact gather, 0/1 exact in bf16

        # Batched embedding lookup fused with input projection + merged biases (f32 acc).
        x_all = jnp.dot(one_hot, emb_ih_pad,
                        preferred_element_type=jnp.float32) + bias_pad   # (T*b_tile, 128) f32

        # Serial recurrence: the only true data dependence.  T is tiny & static here,
        # so a Python unroll is fine (see header note for the fori_loop variant).
        h = jnp.zeros((b_tile, LANES), jnp.float32)
        for t in range(T):
            x_t = x_all[t * b_tile:(t + 1) * b_tile, :]        # 8-row-aligned static slice
            h = jnp.tanh(x_t + jnp.dot(h.astype(slab_dtype), w_hh_pad,
                                       preferred_element_type=jnp.float32))

        logits = jnp.dot(h.astype(slab_dtype), w_c_pad,
                         preferred_element_type=jnp.float32) + b_c_pad   # (b_tile, 128) f32

        if not compute_loss:
            # Lane-dense, full-vreg (b_tile, 128) store; padded lanes are exactly 0.
            out_ref[...] = logits
        else:
            # Fused cross-entropy: masked logsumexp over the first C lanes + label gather.
            lane = jax.lax.broadcasted_iota(jnp.int32, (b_tile, LANES), 1)
            masked = jnp.where(lane < C, logits, jnp.float32(-1e30))
            m = jnp.max(masked, axis=-1, keepdims=True)
            lse = m + jnp.log(jnp.sum(jnp.exp(masked - m), axis=-1, keepdims=True))
            y_col = y_ref[...]                                  # (b_tile, 1) int32
            picked = jnp.sum(jnp.where(lane == y_col, logits, 0.0), axis=-1, keepdims=True)
            row = (pl.program_id(0) * b_tile
                   + jax.lax.broadcasted_iota(jnp.int32, (b_tile, 1), 0))
            valid = (row < B).astype(jnp.float32)               # mask batch-padded rows
            out_ref[...] = (lse - picked) * valid               # per-row NLL, (b_tile, 1)

    ids_spec = pl.BlockSpec((T * b_tile, 1), lambda i: (i, 0))
    slab_spec = pl.BlockSpec((ROWS, LANES), lambda i: (0, 0))   # constant -> fetched once
    compiler_params = pltpu.CompilerParams(
        dimension_semantics=("parallel",),          # split batch tiles across v7x's 2 TCs
        vmem_limit_bytes=32 * 1024 * 1024,          # explicit budget, safe on v5e/v6e/v7x
    )

    if compute_loss:
        y_pad = jnp.zeros((B_pad, 1), jnp.int32).at[:B, 0].set(y.astype(jnp.int32))
        nll = pl.pallas_call(
            kernel,
            out_shape=jax.ShapeDtypeStruct((B_pad, 1), jnp.float32),
            grid=(num_tiles,),
            in_specs=[ids_spec, pl.BlockSpec((b_tile, 1), lambda i: (i, 0)), slab_spec],
            out_specs=pl.BlockSpec((b_tile, 1), lambda i: (i, 0)),
            compiler_params=compiler_params,
        )(ids, y_pad, slab)
        return jnp.sum(nll) / B                      # mean cross-entropy (torch default)

    logits_pad = pl.pallas_call(
        kernel,
        out_shape=jax.ShapeDtypeStruct((B_pad, LANES), jnp.float32),
        grid=(num_tiles,),
        in_specs=[ids_spec, slab_spec],
        out_specs=pl.BlockSpec((b_tile, LANES), lambda i: (i, 0)),
        compiler_params=compiler_params,
    )(ids, slab)
    return logits_pad[:B, :C]


# ---------------------------------------------------------------------------
# Pure-JAX references (correctness checks)
# ---------------------------------------------------------------------------
def reference_forward(params, x):
    emb, w_ih, b_ih, w_hh, b_hh, w_c, b_c = params
    xe = jnp.take(emb, x, axis=0)                   # (B, T, D)
    h = jnp.zeros((x.shape[0], w_hh.shape[0]), jnp.float32)
    for t in range(x.shape[1]):
        h = jnp.tanh(xe[:, t, :] @ w_ih.T + b_ih + h @ w_hh.T + b_hh)
    return h @ w_c.T + b_c


def reference_loss(params, x, y):
    logits = reference_forward(params, x)
    logz = jax.nn.logsumexp(logits, axis=-1)
    nll = logz - jnp.take_along_axis(logits, y[:, None], axis=-1)[:, 0]
    return jnp.mean(nll)


if __name__ == "__main__":
    # Hyper-parameters implied by the module: classify = nn.Linear(10, 6)
    V = 28          # len(vocab)
    D = 8           # vector_dim
    H = 10          # hidden_size (must be 10 to match Linear(10, 6))
    C = 6           # output classes
    B, T = 4, 6     # batch, sequence length

    key = jax.random.PRNGKey(0)
    k = jax.random.split(key, 10)
    emb = jax.random.normal(k[0], (V, D), jnp.float32) * 0.5
    w_ih = jax.random.normal(k[1], (H, D), jnp.float32) * 0.3
    b_ih = jax.random.normal(k[2], (H,), jnp.float32) * 0.1
    w_hh = jax.random.normal(k[3], (H, H), jnp.float32) * 0.3
    b_hh = jax.random.normal(k[4], (H,), jnp.float32) * 0.1
    w_c = jax.random.normal(k[5], (C, H), jnp.float32) * 0.3
    b_c = jax.random.normal(k[6], (C,), jnp.float32) * 0.1
    params = (emb, w_ih, b_ih, w_hh, b_hh, w_c, b_c)

    x = jax.random.randint(k[7], (B, T), 0, V, dtype=jnp.int32)
    y = jax.random.randint(k[8], (B,), 0, C, dtype=jnp.int32)

    # 1) inference path (f32 slab)
    y_pred = jax.block_until_ready(torch_model_forward(params, x))
    ref = reference_forward(params, x)
    assert y_pred.shape == (B, C)
    assert jnp.allclose(y_pred, ref, atol=1e-4, rtol=1e-4), "logits mismatch vs reference"

    # 2) training path: cross-entropy fused into the kernel
    loss = jax.block_until_ready(torch_model_forward(params, x, y))
    ref_loss = reference_loss(params, x, y)
    assert jnp.allclose(loss, ref_loss, atol=1e-4, rtol=1e-4), "loss mismatch vs reference"

    # 3) multi-tile batch grid (parallel batch axis, padded batch rows)
    B2 = 20
    x2 = jax.random.randint(k[9], (B2, T), 0, V, dtype=jnp.int32)
    y_pred2 = jax.block_until_ready(torch_model_forward(params, x2, b_tile=8))
    assert jnp.allclose(y_pred2, reference_forward(params, x2), atol=1e-4, rtol=1e-4), \
        "multi-tile logits mismatch vs reference"

    # 4) bf16 slab (v6e/v7x MXU-native operands, f32 accumulation / elementwise)
    y_pred_bf16 = jax.block_until_ready(
        torch_model_forward(params, x, slab_dtype=jnp.bfloat16))
    assert jnp.allclose(y_pred_bf16, ref, atol=1e-1, rtol=1e-1), "bf16 path mismatch"

    print("KERNEL_OK")
</pallas_src>

<mosaic_0001>
module attributes {stable_mosaic.version = 11 : i64} {
  func.func @kernel(%arg0: i32, %arg1: memref<48x1xi32, #tpu.memory_space<vmem>>, %arg2: memref<304x128xf32, #tpu.memory_space<vmem>>, %arg3: memref<8x128xf32, #tpu.memory_space<vmem>>) attributes {dimension_semantics = [#tpu.dimension_semantics<parallel>], iteration_bounds = array<i64: 1>, scalar_prefetch = 0 : i64, scratch_operands = 0 : i64, tpu.core_type = #tpu.core_type<tc>, window_params = [{transform_indices = @transform_0, window_bounds = array<i64: 48, 1>}, {pipeline_mode = #tpu.pipeline_mode<synchronous>, transform_indices = @transform_1, window_bounds = array<i64: 304, 128>}, {transform_indices = @transform_2, window_bounds = array<i64: 8, 128>}]} {
    %c0 = arith.constant 0 : index
    %c0_0 = arith.constant 0 : index
    %0 = vector.load %arg2[%c0, %c0_0] : memref<304x128xf32, #tpu.memory_space<vmem>>, vector<32x128xf32>
    %c32 = arith.constant 32 : index
    %c0_1 = arith.constant 0 : index
    %1 = vector.load %arg2[%c32, %c0_1] : memref<304x128xf32, #tpu.memory_space<vmem>>, vector<128x128xf32>
    %c160 = arith.constant 160 : index
    %c0_2 = arith.constant 0 : index
    %2 = vector.load %arg2[%c160, %c0_2] : memref<304x128xf32, #tpu.memory_space<vmem>>, vector<128x128xf32>
    %c288 = arith.constant 288 : index
    %c0_3 = arith.constant 0 : index
    %3 = vector.load %arg2[%c288, %c0_3] : memref<304x128xf32, #tpu.memory_space<vmem>>, vector<1x128xf32>
    %c296 = arith.constant 296 : index
    %c0_4 = arith.constant 0 : index
    %4 = vector.load %arg2[%c296, %c0_4] : memref<304x128xf32, #tpu.memory_space<vmem>>, vector<1x128xf32>
    %c0_5 = arith.constant 0 : index
    %c0_6 = arith.constant 0 : index
    %5 = vector.load %arg1[%c0_5, %c0_6] : memref<48x1xi32, #tpu.memory_space<vmem>>, vector<48x1xi32>
    %6 = tpu.iota {dimensions = array<i32: 1>} : vector<48x32xi32>
    %7 = vector.broadcast %5 : vector<48x1xi32> to vector<48x32xi32>
    %8 = arith.cmpi eq, %7, %6 : vector<48x32xi32>
    %9 = arith.extui %8 : vector<48x32xi1> to vector<48x32xi32>
    %10 = arith.sitofp %9 : vector<48x32xi32> to vector<48x32xf32>
    %cst = arith.constant dense<0.000000e+00> : vector<48x128xf32>
    %11 = tpu.matmul %10, %0, %cst {dimension_numbers = #tpu.dot_dimension_numbers<[1], [0], [0], [1], [0, 0, 1, 1], [], []>} : vector<48x32xf32>, vector<32x128xf32>, vector<48x128xf32> -> vector<48x128xf32>
    %12 = vector.broadcast %3 : vector<1x128xf32> to vector<48x128xf32>
    %13 = arith.addf %11, %12 : vector<48x128xf32>
    %cst_7 = arith.constant 0.000000e+00 : f32
    %14 = vector.broadcast %cst_7 : f32 to vector<8x128xf32>
    %15 = vector.extract_strided_slice %13 {offsets = [0, 0], sizes = [8, 128], strides = [1, 1]} : vector<48x128xf32> to vector<8x128xf32>
    %cst_8 = arith.constant dense<0.000000e+00> : vector<8x128xf32>
    %16 = tpu.matmul %14, %1, %cst_8 {dimension_numbers = #tpu.dot_dimension_numbers<[1], [0], [0], [1], [0, 0, 1, 1], [], []>} : vector<8x128xf32>, vector<128x128xf32>, vector<8x128xf32> -> vector<8x128xf32>
    %17 = arith.addf %15, %16 : vector<8x128xf32>
    %18 = math.tanh %17 : vector<8x128xf32>
    %19 = vector.extract_strided_slice %13 {offsets = [8, 0], sizes = [8, 128], strides = [1, 1]} : vector<48x128xf32> to vector<8x128xf32>
    %cst_9 = arith.constant dense<0.000000e+00> : vector<8x128xf32>
    %20 = tpu.matmul %18, %1, %cst_9 {dimension_numbers = #tpu.dot_dimension_numbers<[1], [0], [0], [1], [0, 0, 1, 1], [], []>} : vector<8x128xf32>, vector<128x128xf32>, vector<8x128xf32> -> vector<8x128xf32>
    %21 = arith.addf %19, %20 : vector<8x128xf32>
    %22 = math.tanh %21 : vector<8x128xf32>
    %23 = vector.extract_strided_slice %13 {offsets = [16, 0], sizes = [8, 128], strides = [1, 1]} : vector<48x128xf32> to vector<8x128xf32>
    %cst_10 = arith.constant dense<0.000000e+00> : vector<8x128xf32>
    %24 = tpu.matmul %22, %1, %cst_10 {dimension_numbers = #tpu.dot_dimension_numbers<[1], [0], [0], [1], [0, 0, 1, 1], [], []>} : vector<8x128xf32>, vector<128x128xf32>, vector<8x128xf32> -> vector<8x128xf32>
    %25 = arith.addf %23, %24 : vector<8x128xf32>
    %26 = math.tanh %25 : vector<8x128xf32>
    %27 = vector.extract_strided_slice %13 {offsets = [24, 0], sizes = [8, 128], strides = [1, 1]} : vector<48x128xf32> to vector<8x128xf32>
    %cst_11 = arith.constant dense<0.000000e+00> : vector<8x128xf32>
    %28 = tpu.matmul %26, %1, %cst_11 {dimension_numbers = #tpu.dot_dimension_numbers<[1], [0], [0], [1], [0, 0, 1, 1], [], []>} : vector<8x128xf32>, vector<128x128xf32>, vector<8x128xf32> -> vector<8x128xf32>
    %29 = arith.addf %27, %28 : vector<8x128xf32>
    %30 = math.tanh %29 : vector<8x128xf32>
    %31 = vector.extract_strided_slice %13 {offsets = [32, 0], sizes = [8, 128], strides = [1, 1]} : vector<48x128xf32> to vector<8x128xf32>
    %cst_12 = arith.constant dense<0.000000e+00> : vector<8x128xf32>
    %32 = tpu.matmul %30, %1, %cst_12 {dimension_numbers = #tpu.dot_dimension_numbers<[1], [0], [0], [1], [0, 0, 1, 1], [], []>} : vector<8x128xf32>, vector<128x128xf32>, vector<8x128xf32> -> vector<8x128xf32>
    %33 = arith.addf %31, %32 : vector<8x128xf32>
    %34 = math.tanh %33 : vector<8x128xf32>
    %35 = vector.extract_strided_slice %13 {offsets = [40, 0], sizes = [8, 128], strides = [1, 1]} : vector<48x128xf32> to vector<8x128xf32>
    %cst_13 = arith.constant dense<0.000000e+00> : vector<8x128xf32>
    %36 = tpu.matmul %34, %1, %cst_13 {dimension_numbers = #tpu.dot_dimension_numbers<[1], [0], [0], [1], [0, 0, 1, 1], [], []>} : vector<8x128xf32>, vector<128x128xf32>, vector<8x128xf32> -> vector<8x128xf32>
    %37 = arith.addf %35, %36 : vector<8x128xf32>
    %38 = math.tanh %37 : vector<8x128xf32>
    %cst_14 = arith.constant dense<0.000000e+00> : vector<8x128xf32>
    %39 = tpu.matmul %38, %2, %cst_14 {dimension_numbers = #tpu.dot_dimension_numbers<[1], [0], [0], [1], [0, 0, 1, 1], [], []>} : vector<8x128xf32>, vector<128x128xf32>, vector<8x128xf32> -> vector<8x128xf32>
    %40 = vector.broadcast %4 : vector<1x128xf32> to vector<8x128xf32>
    %41 = arith.addf %39, %40 : vector<8x128xf32>
    %c0_15 = arith.constant 0 : index
    %c0_16 = arith.constant 0 : index
    %42 = vector.load %arg3[%c0_15, %c0_16] : memref<8x128xf32, #tpu.memory_space<vmem>>, vector<8x128xf32>
    tpu.vector_store %arg3[%c0_15, %c0_16], %41 {strides = array<i32>} : memref<8x128xf32, #tpu.memory_space<vmem>>, vector<8x128xf32>,
    return
  }
  func.func @transform_0(%arg0: i32) -> (i32, i32) {
    %c0_i32 = arith.constant 0 : i32
    %c0_i32_0 = arith.constant 0 : i32
    return %arg0, %c0_i32 : i32, i32
  }
  func.func @transform_1(%arg0: i32) -> (i32, i32) {
    %c0_i32 = arith.constant 0 : i32
    %c0_i32_0 = arith.constant 0 : i32
    %c0_i32_1 = arith.constant 0 : i32
    return %c0_i32, %c0_i32_0 : i32, i32
  }
  func.func @transform_2(%arg0: i32) -> (i32, i32) {
    %c0_i32 = arith.constant 0 : i32
    %c0_i32_0 = arith.constant 0 : i32
    return %arg0, %c0_i32 : i32, i32
  }
}

</mosaic_0001>

<llo_original>
// kernel: tpu_custom_call.1
$region0: #{tpu_custom_call.1}
  #allocation0 [shape = 'u32[]', space=smem, size = 0x4, offset = 0x4, fixed_abs, tag = 'smem constant byte address 0x4 - core index']
  #allocation1 [shape = 'u32[144,128]{1,0:T(1,128)}', space=vmem, size = 0x12000, scoped, tag = 'internal scratch']
  %s0 = inlined_call_operand.vmem [shape: s32[48,1], index: 0, kind: input, shape index: {}]
  %s1 = inlined_call_operand.hbm [shape: f32[304,128], index: 1, kind: input, shape index: {}]
  %s2 = inlined_call_operand.hbm [shape: f32[8,128], index: 2, kind: output, shape index: {}]
  %s3 = sld [smem:[#allocation0]]
  $region22: #{tpu_custom_call.1} parent=0
    _
  %s5 = ssub.s32 1, %s3
  %s6 = scalar_select 0, %s5, %s3
  $region1: #{tpu_custom_call.1} parent=0
    #allocation2 [shape = 'u8[155648]{0}', space=vmem, size = 0x26000, scoped, tag = 'input window, operand 1, single buffered']
    #allocation3 [shape = 's32[1]{0}', space=sflag, size = 0x4, scoped, tag = 'scoped memory for tpu_custom_call.1']
    #allocation4 [shape = 's32[1]{0}', space=sflag, size = 0x4, scoped, tag = 'scoped memory for tpu_custom_call.1']
    #allocation5 [shape = 'u8[4096]{0}', space=vmem, size = 0x1000, scoped, tag = 'output window, operand 0, single buffered']
    %7 = vsyncpa [#allocation3], 0
    %8 = vsyncpa [#allocation4], 0
    // Predicated region
    $region2: #{tpu_custom_call.1} parent=1 // pred_check
      _
    $region3: #{tpu_custom_call.1} parent=1 // pred_check_branch
      %10 = sbr.rel (0) target = $region5
    $region4: #{tpu_custom_call.1} parent=1 // pred_region
      _
    $region5: #{tpu_custom_call.1} parent=1 // pred_fallthru
      _
    // Predicated region
    $region6: #{tpu_custom_call.1} parent=1 // pred_check
      _
    $region7: #{tpu_custom_call.1} parent=1 // pred_check_branch
      %12 = sbr.rel (0) target = $region9
    $region8: #{tpu_custom_call.1} parent=1 // pred_region
      %s14 = ssub.s32 4864, 4864
      %15 = vsyncadd [#allocation3], %s14
      %s16 = sshll.u32 [#allocation2], 4
      %s17 = int_to_ptr.vmem [resolvable:$true] %s16
      %22 = dma.hbm_to_vmem [thread:$0]  %s1, 4864, %s17, [#allocation3], 128, 128, 8
    $region9: #{tpu_custom_call.1} parent=1 // pred_fallthru
      _
    // Predicated region
    $region10: #{tpu_custom_call.1} parent=1 // pred_check
      _
    $region11: #{tpu_custom_call.1} parent=1 // pred_check_branch
      %24 = sbr.rel (0) target = $region13
    $region12: #{tpu_custom_call.1} parent=1 // pred_region
      %25 = dma.done [#allocation3], 4864
    $region13: #{tpu_custom_call.1} parent=1 // pred_fallthru
      _
    %v26 = vld [vmem:[#allocation2] sm:$0xff]
    %v27 = vld [vmem:[#allocation2 + $0x8] sm:$0xff]
    %v28 = vld [vmem:[#allocation2 + $0x10] sm:$0xff]
    %v29 = vld [vmem:[#allocation2 + $0x18] sm:$0xff]
    %v30 = vld [vmem:[#allocation2 + $0x20] sm:$0xff]
    %v31 = vld [vmem:[#allocation2 + $0x28] sm:$0xff]
    %v32 = vld [vmem:[#allocation2 + $0x30] sm:$0xff]
    %v33 = vld [vmem:[#allocation2 + $0x38] sm:$0xff]
    %v34 = vld [vmem:[#allocation2 + $0x40] sm:$0xff]
    %v35 = vld [vmem:[#allocation2 + $0x48] sm:$0xff]
    %v36 = vld [vmem:[#allocation2 + $0x50] sm:$0xff]
    %v37 = vld [vmem:[#allocation2 + $0x58] sm:$0xff]
    %v38 = vld [vmem:[#allocation2 + $0x60] sm:$0xff]
    %v39 = vld [vmem:[#allocation2 + $0x68] sm:$0xff]
    %v40 = vld [vmem:[#allocation2 + $0x70] sm:$0xff]
    %v41 = vld [vmem:[#allocation2 + $0x78] sm:$0xff]
    %v42 = vld [vmem:[#allocation2 + $0x80] sm:$0xff]
    %v43 = vld [vmem:[#allocation2 + $0x88] sm:$0xff]
    %v44 = vld [vmem:[#allocation2 + $0x90] sm:$0xff]
    %v45 = vld [vmem:[#allocation2 + $0x98] sm:$0xff]
    %v46 = vld [vmem:[#allocation2 + $0xa0] sm:$0xff]
    %v47 = vld [vmem:[#allocation2 + $0xa8] sm:$0xff]
    %v48 = vld [vmem:[#allocation2 + $0xb0] sm:$0xff]
    %v49 = vld [vmem:[#allocation2 + $0xb8] sm:$0xff]
    %v50 = vld [vmem:[#allocation2 + $0xc0] sm:$0xff]
    %v51 = vld [vmem:[#allocation2 + $0xc8] sm:$0xff]
    %v52 = vld [vmem:[#allocation2 + $0xd0] sm:$0xff]
    %v53 = vld [vmem:[#allocation2 + $0xd8] sm:$0xff]
    %v54 = vld [vmem:[#allocation2 + $0xe0] sm:$0xff]
    %v55 = vld [vmem:[#allocation2 + $0xe8] sm:$0xff]
    %v56 = vld [vmem:[#allocation2 + $0xf0] sm:$0xff]
    %v57 = vld [vmem:[#allocation2 + $0xf8] sm:$0xff]
    %v58 = vld [vmem:[#allocation2 + $0x100] sm:$0xff]
    %v59 = vld [vmem:[#allocation2 + $0x108] sm:$0xff]
    %v60 = vld [vmem:[#allocation2 + $0x110] sm:$0xff]
    %v61 = vld [vmem:[#allocation2 + $0x118] sm:$0xff]
    %v62 = vld [vmem:[#allocation2 + $0x120] sm:$0x1]
    %v63 = vld [vmem:[#allocation2 + $0x128] sm:$0x1]
    %v64 = vld [vmem:[%s0] sm:$0xff]
    %v65 = vld [vmem:[%s0 + $0x8] sm:$0xff]
    %v66 = vld [vmem:[%s0 + $0x10] sm:$0xff]
    %v67 = vld [vmem:[%s0 + $0x18] sm:$0xff]
    %v68 = vld [vmem:[%s0 + $0x20] sm:$0xff]
    %v69 = vld [vmem:[%s0 + $0x28] sm:$0xff]
    %v70 = vlaneseq
    %v71 = vand.u32 %v70, 127
    %72 = vset.pattern.permute.xlu0 0
    %73 = vperm.xlu0 %72, %v64
    %v74 = vpop.permute.xlu0 %73
    %75 = vset.pattern.permute.xlu0 0
    %76 = vperm.xlu0 %75, %v65
    %v77 = vpop.permute.xlu0 %76
    %78 = vset.pattern.permute.xlu0 0
    %79 = vperm.xlu0 %78, %v66
    %v80 = vpop.permute.xlu0 %79
    %81 = vset.pattern.permute.xlu0 0
    %82 = vperm.xlu0 %81, %v67
    %v83 = vpop.permute.xlu0 %82
    %84 = vset.pattern.permute.xlu0 0
    %85 = vperm.xlu0 %84, %v68
    %v86 = vpop.permute.xlu0 %85
    %87 = vset.pattern.permute.xlu0 0
    %88 = vperm.xlu0 %87, %v69
    %v89 = vpop.permute.xlu0 %88
    %vm90 = vcmp.eq.s32.totalorder %v74, %v71
    %vm91 = vcmp.eq.s32.totalorder %v77, %v71
    %vm92 = vcmp.eq.s32.totalorder %v80, %v71
    %vm93 = vcmp.eq.s32.totalorder %v83, %v71
    %vm94 = vcmp.eq.s32.totalorder %v86, %v71
    %vm95 = vcmp.eq.s32.totalorder %v89, %v71
    %v96 = vsel %vm90, 1, 0
    %v97 = vsel %vm91, 1, 0
    %v98 = vsel %vm92, 1, 0
    %v99 = vsel %vm93, 1, 0
    %v100 = vsel %vm94, 1, 0
    %v101 = vsel %vm95, 1, 0
    %v102 = vcvt.s32.f32 %v96
    %v103 = vcvt.s32.f32 %v97
    %v104 = vcvt.s32.f32 %v98
    %v105 = vcvt.s32.f32 %v99
    %v106 = vcvt.s32.f32 %v100
    %v107 = vcvt.s32.f32 %v101
    %v108 = vlaneseq
    %v109 = vshrl.u32 %v108, 7
    %v110 = vsub.s32 0, %v109
    %v111 = vrot.slane %v62, %v110
    %vm112 = vcmask 261120
    %v114 = vsel %vm112, %v102, 0
    %v117 = vsel %vm112, %v103, 0
    %v120 = vsel %vm112, %v104, 0
    %v123 = vsel %vm112, %v105, 0
    %v126 = vsel %vm112, %v106, 0
    %v129 = vsel %vm112, %v107, 0
    %131 = vmatprep.subr.mxu0 0.0
    %132 = vmatpush1.msra.mxu0 0.0
    %133 = vmatprep.subr.mxu0 0.0
    %134 = vmatpush1.msra.mxu0 0.0
    %135 = vmatprep.subr.mxu0 0.0
    %136 = vmatpush1.msra.mxu0 0.0
    %137 = vmatprep.subr.mxu0 0.0
    %138 = vmatpush1.msra.mxu0 0.0
    %139 = vmatprep.subr.mxu0 0.0
    %140 = vmatpush1.msra.mxu0 0.0
    %141 = vmatprep.subr.mxu0 0.0
    %142 = vmatpush1.msra.mxu0 0.0
    %143 = vmatprep.subr.mxu0 0.0
    %144 = vmatpush1.msra.mxu0 0.0
    %145 = vmatprep.subr.mxu0 0.0
    %146 = vmatpush1.msra.mxu0 0.0
    %147 = vmatprep.subr.mxu0 0.0
    %148 = vmatpush1.msra.mxu0 0.0
    %149 = vmatprep.subr.mxu0 0.0
    %150 = vmatpush1.msra.mxu0 0.0
    %151 = vmatprep.subr.mxu0 0.0
    %152 = vmatpush1.msra.mxu0 0.0
    %153 = vmatprep.subr.mxu0 0.0
    %154 = vmatpush1.msra.mxu0 0.0
    %155 = vmatprep.subr.mxu0 0.0
    %156 = vmatpush1.msra.mxu0 %v29
    %157 = vmatprep.subr.mxu0 0.0
    %158 = vmatpush1.msra.mxu0 %v28
    %159 = vmatprep.subr.mxu0 0.0
    %160 = vmatpush1.msra.mxu0 %v27
    %161 = vmatprep.subr.mxu0 0.0
    %162 = vmatpush1.msra.mxu0 %v26
    %163 = vmatprep.subr.mxu0 0.0
    %164 = vmatpush2.msra.mxu0 0.0
    %165 = vmatprep.subr.mxu0 0.0
    %166 = vmatpush2.msra.mxu0 0.0
    %167 = vmatprep.subr.mxu0 0.0
    %168 = vmatpush2.msra.mxu0 0.0
    %169 = vmatprep.subr.mxu0 0.0
    %170 = vmatpush2.msra.mxu0 0.0
    %171 = vmatprep.subr.mxu0 0.0
    %172 = vmatpush2.msra.mxu0 0.0
    %173 = vmatprep.subr.mxu0 0.0
    %174 = vmatpush2.msra.mxu0 0.0
    %175 = vmatprep.subr.mxu0 0.0
    %176 = vmatpush2.msra.mxu0 0.0
    %177 = vmatprep.subr.mxu0 0.0
    %178 = vmatpush2.msra.mxu0 0.0
    %179 = vmatprep.subr.mxu0 0.0
    %180 = vmatpush2.msra.mxu0 0.0
    %181 = vmatprep.subr.mxu0 0.0
    %182 = vmatpush2.msra.mxu0 0.0
    %183 = vmatprep.subr.mxu0 0.0
    %184 = vmatpush2.msra.mxu0 0.0
    %185 = vmatprep.subr.mxu0 0.0
    %186 = vmatpush2.msra.mxu0 0.0
    %187 = vmatprep.subr.mxu0 0.0
    %188 = vmatpush2.msra.mxu0 0.0
    %189 = vmatprep.subr.mxu0 0.0
    %190 = vmatpush2.msra.mxu0 0.0
    %191 = vmatprep.subr.mxu0 0.0
    %192 = vmatpush2.msra.mxu0 0.0
    %193 = vmatprep.subr.mxu0 0.0
    %194 = vmatpush2.msra.mxu0 0.0
    %195 = vmatprep.mubr.f32.mxu0 0.0
    %196 = vmatmul.mubr.f32.gmra.mxu0 %v114
    %v197 = vpop.f32.mrf.mxu0
    %v198 = vadd.f32 %v111, %v197
    %v199 = vpop.f32.mrf.mxu0
    %200 = vmatprep.mubr.f32.mxu0 0.0
    %201 = vmatmul.mubr.f32.gmra.mxu0 %v117
    %v202 = vpop.f32.mrf.mxu0
    %v203 = vadd.f32 %v111, %v202
    %v204 = vpop.f32.mrf.mxu0
    %205 = vmatprep.mubr.f32.mxu0 0.0
    %206 = vmatmul.mubr.f32.gmra.mxu0 %v120
    %v207 = vpop.f32.mrf.mxu0
    %v208 = vadd.f32 %v111, %v207
    %v209 = vpop.f32.mrf.mxu0
    %210 = vmatprep.mubr.f32.mxu0 0.0
    %211 = vmatmul.mubr.f32.gmra.mxu0 %v123
    %v212 = vpop.f32.mrf.mxu0
    %v213 = vadd.f32 %v111, %v212
    %v214 = vpop.f32.mrf.mxu0
    %215 = vmatprep.mubr.f32.mxu0 0.0
    %216 = vmatmul.mubr.f32.gmra.mxu0 %v126
    %v217 = vpop.f32.mrf.mxu0
    %v218 = vadd.f32 %v111, %v217
    %v219 = vpop.f32.mrf.mxu0
    %220 = vmatprep.mubr.f32.mxu0 0.0
    %221 = vmatmul.mubr.f32.gmra.mxu0 %v129
    %v222 = vpop.f32.mrf.mxu0
    %v223 = vadd.f32 %v111, %v222
    %v224 = vpop.f32.mrf.mxu0
    %225 = vdwg.mxu0
    %226 = vmatprep.subr.mxu0 0.0
    %227 = vmatpush1.msra.mxu0 %v45
    %228 = vmatprep.subr.mxu0 0.0
    %229 = vmatpush1.msra.mxu0 %v44
    %230 = vmatprep.subr.mxu0 0.0
    %231 = vmatpush1.msra.mxu0 %v43
    %232 = vmatprep.subr.mxu0 0.0
    %233 = vmatpush1.msra.mxu0 %v42
    %234 = vmatprep.subr.mxu0 0.0
    %235 = vmatpush1.msra.mxu0 %v41
    %236 = vmatprep.subr.mxu0 0.0
    %237 = vmatpush1.msra.mxu0 %v40
    %238 = vmatprep.subr.mxu0 0.0
    %239 = vmatpush1.msra.mxu0 %v39
    %240 = vmatprep.subr.mxu0 0.0
    %241 = vmatpush1.msra.mxu0 %v38
    %242 = vmatprep.subr.mxu0 0.0
    %243 = vmatpush1.msra.mxu0 %v37
    %244 = vmatprep.subr.mxu0 0.0
    %245 = vmatpush1.msra.mxu0 %v36
    %246 = vmatprep.subr.mxu0 0.0
    %247 = vmatpush1.msra.mxu0 %v35
    %248 = vmatprep.subr.mxu0 0.0
    %249 = vmatpush1.msra.mxu0 %v34
    %250 = vmatprep.subr.mxu0 0.0
    %251 = vmatpush1.msra.mxu0 %v33
    %252 = vmatprep.subr.mxu0 0.0
    %253 = vmatpush1.msra.mxu0 %v32
    %254 = vmatprep.subr.mxu0 0.0
    %255 = vmatpush1.msra.mxu0 %v31
    %256 = vmatprep.subr.mxu0 0.0
    %257 = vmatpush1.msra.mxu0 %v30
    %258 = vmatprep.subr.mxu0 0.0
    %259 = vmatpush2.msra.mxu0 0.0
    %260 = vmatprep.subr.mxu0 0.0
    %261 = vmatpush2.msra.mxu0 0.0
    %262 = vmatprep.subr.mxu0 0.0
    %263 = vmatpush2.msra.mxu0 0.0
    %264 = vmatprep.subr.mxu0 0.0
    %265 = vmatpush2.msra.mxu0 0.0
    %266 = vmatprep.subr.mxu0 0.0
    %267 = vmatpush2.msra.mxu0 0.0
    %268 = vmatprep.subr.mxu0 0.0
    %269 = vmatpush2.msra.mxu0 0.0
    %270 = vmatprep.subr.mxu0 0.0
    %271 = vmatpush2.msra.mxu0 0.0
    %272 = vmatprep.subr.mxu0 0.0
    %273 = vmatpush2.msra.mxu0 0.0
    %274 = vmatprep.subr.mxu0 0.0
    %275 = vmatpush2.msra.mxu0 0.0
    %276 = vmatprep.subr.mxu0 0.0
    %277 = vmatpush2.msra.mxu0 0.0
    %278 = vmatprep.subr.mxu0 0.0
    %279 = vmatpush2.msra.mxu0 0.0
    %280 = vmatprep.subr.mxu0 0.0
    %281 = vmatpush2.msra.mxu0 0.0
    %282 = vmatprep.subr.mxu0 0.0
    %283 = vmatpush2.msra.mxu0 0.0
    %284 = vmatprep.subr.mxu0 0.0
    %285 = vmatpush2.msra.mxu0 0.0
    %286 = vmatprep.subr.mxu0 0.0
    %287 = vmatpush2.msra.mxu0 0.0
    %288 = vmatprep.subr.mxu0 0.0
    %289 = vmatpush2.msra.mxu0 0.0
    %290 = vmatprep.mubr.f32.mxu0 0.0
    %291 = vmatmul.mubr.f32.gmra.mxu0 0.0
    %v292 = vpop.f32.mrf.mxu0
    %v293 = vadd.f32 0.0, %v292
    %v294 = vpop.f32.mrf.mxu0
    %295 = vdwg.mxu0
    %v296 = vadd.f32 %v198, %v293
    %v297 = vtanh.pop %v296
    %298 = vmatprep.subr.mxu0 0.0
    %299 = vmatpush1.msra.mxu0 %v45
    %300 = vmatprep.subr.mxu0 0.0
    %301 = vmatpush1.msra.mxu0 %v44
    %302 = vmatprep.subr.mxu0 0.0
    %303 = vmatpush1.msra.mxu0 %v43
    %304 = vmatprep.subr.mxu0 0.0
    %305 = vmatpush1.msra.mxu0 %v42
    %306 = vmatprep.subr.mxu0 0.0
    %307 = vmatpush1.msra.mxu0 %v41
    %308 = vmatprep.subr.mxu0 0.0
    %309 = vmatpush1.msra.mxu0 %v40
    %310 = vmatprep.subr.mxu0 0.0
    %311 = vmatpush1.msra.mxu0 %v39
    %312 = vmatprep.subr.mxu0 0.0
    %313 = vmatpush1.msra.mxu0 %v38
    %314 = vmatprep.subr.mxu0 0.0
    %315 = vmatpush1.msra.mxu0 %v37
    %316 = vmatprep.subr.mxu0 0.0
    %317 = vmatpush1.msra.mxu0 %v36
    %318 = vmatprep.subr.mxu0 0.0
    %319 = vmatpush1.msra.mxu0 %v35
    %320 = vmatprep.subr.mxu0 0.0
    %321 = vmatpush1.msra.mxu0 %v34
    %322 = vmatprep.subr.mxu0 0.0
    %323 = vmatpush1.msra.mxu0 %v33
    %324 = vmatprep.subr.mxu0 0.0
    %325 = vmatpush1.msra.mxu0 %v32
    %326 = vmatprep.subr.mxu0 0.0
    %327 = vmatpush1.msra.mxu0 %v31
    %328 = vmatprep.subr.mxu0 0.0
    %329 = vmatpush1.msra.mxu0 %v30
    %330 = vmatprep.subr.mxu0 0.0
    %331 = vmatpush2.msra.mxu0 0.0
    %332 = vmatprep.subr.mxu0 0.0
    %333 = vmatpush2.msra.mxu0 0.0
    %334 = vmatprep.subr.mxu0 0.0
    %335 = vmatpush2.msra.mxu0 0.0
    %336 = vmatprep.subr.mxu0 0.0
    %337 = vmatpush2.msra.mxu0 0.0
    %338 = vmatprep.subr.mxu0 0.0
    %339 = vmatpush2.msra.mxu0 0.0
    %340 = vmatprep.subr.mxu0 0.0
    %341 = vmatpush2.msra.mxu0 0.0
    %342 = vmatprep.subr.mxu0 0.0
    %343 = vmatpush2.msra.mxu0 0.0
    %344 = vmatprep.subr.mxu0 0.0
    %345 = vmatpush2.msra.mxu0 0.0
    %346 = vmatprep.subr.mxu0 0.0
    %347 = vmatpush2.msra.mxu0 0.0
    %348 = vmatprep.subr.mxu0 0.0
    %349 = vmatpush2.msra.mxu0 0.0
    %350 = vmatprep.subr.mxu0 0.0
    %351 = vmatpush2.msra.mxu0 0.0
    %352 = vmatprep.subr.mxu0 0.0
    %353 = vmatpush2.msra.mxu0 0.0
    %354 = vmatprep.subr.mxu0 0.0
    %355 = vmatpush2.msra.mxu0 0.0
    %356 = vmatprep.subr.mxu0 0.0
    %357 = vmatpush2.msra.mxu0 0.0
    %358 = vmatprep.subr.mxu0 0.0
    %359 = vmatpush2.msra.mxu0 0.0
    %360 = vmatprep.subr.mxu0 0.0
    %361 = vmatpush2.msra.mxu0 0.0
    %362 = vmatprep.mubr.f32.mxu0 0.0
    %363 = vmatmul.mubr.f32.gmra.mxu0 %v297
    %v364 = vpop.f32.mrf.mxu0
    %v365 = vadd.f32 0.0, %v364
    %v366 = vpop.f32.mrf.mxu0
    %367 = vdwg.mxu0
    %v368 = vadd.f32 %v203, %v365
    %v369 = vtanh.pop %v368
    %370 = vmatprep.subr.mxu0 0.0
    %371 = vmatpush1.msra.mxu0 %v45
    %372 = vmatprep.subr.mxu0 0.0
    %373 = vmatpush1.msra.mxu0 %v44
    %374 = vmatprep.subr.mxu0 0.0
    %375 = vmatpush1.msra.mxu0 %v43
    %376 = vmatprep.subr.mxu0 0.0
    %377 = vmatpush1.msra.mxu0 %v42
    %378 = vmatprep.subr.mxu0 0.0
    %379 = vmatpush1.msra.mxu0 %v41
    %380 = vmatprep.subr.mxu0 0.0
    %381 = vmatpush1.msra.mxu0 %v40
    %382 = vmatprep.subr.mxu0 0.0
    %383 = vmatpush1.msra.mxu0 %v39
    %384 = vmatprep.subr.mxu0 0.0
    %385 = vmatpush1.msra.mxu0 %v38
    %386 = vmatprep.subr.mxu0 0.0
    %387 = vmatpush1.msra.mxu0 %v37
    %388 = vmatprep.subr.mxu0 0.0
    %389 = vmatpush1.msra.mxu0 %v36
    %390 = vmatprep.subr.mxu0 0.0
    %391 = vmatpush1.msra.mxu0 %v35
    %392 = vmatprep.subr.mxu0 0.0
    %393 = vmatpush1.msra.mxu0 %v34
    %394 = vmatprep.subr.mxu0 0.0
    %395 = vmatpush1.msra.mxu0 %v33
    %396 = vmatprep.subr.mxu0 0.0
    %397 = vmatpush1.msra.mxu0 %v32
    %398 = vmatprep.subr.mxu0 0.0
    %399 = vmatpush1.msra.mxu0 %v31
    %400 = vmatprep.subr.mxu0 0.0
    %401 = vmatpush1.msra.mxu0 %v30
    %402 = vmatprep.subr.mxu0 0.0
    %403 = vmatpush2.msra.mxu0 0.0
    %404 = vmatprep.subr.mxu0 0.0
    %405 = vmatpush2.msra.mxu0 0.0
    %406 = vmatprep.subr.mxu0 0.0
    %407 = vmatpush2.msra.mxu0 0.0
    %408 = vmatprep.subr.mxu0 0.0
    %409 = vmatpush2.msra.mxu0 0.0
    %410 = vmatprep.subr.mxu0 0.0
    %411 = vmatpush2.msra.mxu0 0.0
    %412 = vmatprep.subr.mxu0 0.0
    %413 = vmatpush2.msra.mxu0 0.0
    %414 = vmatprep.subr.mxu0 0.0
    %415 = vmatpush2.msra.mxu0 0.0
    %416 = vmatprep.subr.mxu0 0.0
    %417 = vmatpush2.msra.mxu0 0.0
    %418 = vmatprep.subr.mxu0 0.0
    %419 = vmatpush2.msra.mxu0 0.0
    %420 = vmatprep.subr.mxu0 0.0
    %421 = vmatpush2.msra.mxu0 0.0
    %422 = vmatprep.subr.mxu0 0.0
    %423 = vmatpush2.msra.mxu0 0.0
    %424 = vmatprep.subr.mxu0 0.0
    %425 = vmatpush2.msra.mxu0 0.0
    %426 = vmatprep.subr.mxu0 0.0
    %427 = vmatpush2.msra.mxu0 0.0
    %428 = vmatprep.subr.mxu0 0.0
    %429 = vmatpush2.msra.mxu0 0.0
    %430 = vmatprep.subr.mxu0 0.0
    %431 = vmatpush2.msra.mxu0 0.0
    %432 = vmatprep.subr.mxu0 0.0
    %433 = vmatpush2.msra.mxu0 0.0
    %434 = vmatprep.mubr.f32.mxu0 0.0
    %435 = vmatmul.mubr.f32.gmra.mxu0 %v369
    %v436 = vpop.f32.mrf.mxu0
    %v437 = vadd.f32 0.0, %v436
    %v438 = vpop.f32.mrf.mxu0
    %439 = vdwg.mxu0
    %v440 = vadd.f32 %v208, %v437
    %v441 = vtanh.pop %v440
    %442 = vmatprep.subr.mxu0 0.0
    %443 = vmatpush1.msra.mxu0 %v45
    %444 = vmatprep.subr.mxu0 0.0
    %445 = vmatpush1.msra.mxu0 %v44
    %446 = vmatprep.subr.mxu0 0.0
    %447 = vmatpush1.msra.mxu0 %v43
    %448 = vmatprep.subr.mxu0 0.0
    %449 = vmatpush1.msra.mxu0 %v42
    %450 = vmatprep.subr.mxu0 0.0
    %451 = vmatpush1.msra.mxu0 %v41
    %452 = vmatprep.subr.mxu0 0.0
    %453 = vmatpush1.msra.mxu0 %v40
    %454 = vmatprep.subr.mxu0 0.0
    %455 = vmatpush1.msra.mxu0 %v39
    %456 = vmatprep.subr.mxu0 0.0
    %457 = vmatpush1.msra.mxu0 %v38
    %458 = vmatprep.subr.mxu0 0.0
    %459 = vmatpush1.msra.mxu0 %v37
    %460 = vmatprep.subr.mxu0 0.0
    %461 = vmatpush1.msra.mxu0 %v36
    %462 = vmatprep.subr.mxu0 0.0
    %463 = vmatpush1.msra.mxu0 %v35
    %464 = vmatprep.subr.mxu0 0.0
    %465 = vmatpush1.msra.mxu0 %v34
    %466 = vmatprep.subr.mxu0 0.0
    %467 = vmatpush1.msra.mxu0 %v33
    %468 = vmatprep.subr.mxu0 0.0
    %469 = vmatpush1.msra.mxu0 %v32
    %470 = vmatprep.subr.mxu0 0.0
    %471 = vmatpush1.msra.mxu0 %v31
    %472 = vmatprep.subr.mxu0 0.0
    %473 = vmatpush1.msra.mxu0 %v30
    %474 = vmatprep.subr.mxu0 0.0
    %475 = vmatpush2.msra.mxu0 0.0
    %476 = vmatprep.subr.mxu0 0.0
    %477 = vmatpush2.msra.mxu0 0.0
    %478 = vmatprep.subr.mxu0 0.0
    %479 = vmatpush2.msra.mxu0 0.0
    %480 = vmatprep.subr.mxu0 0.0
    %481 = vmatpush2.msra.mxu0 0.0
    %482 = vmatprep.subr.mxu0 0.0
    %483 = vmatpush2.msra.mxu0 0.0
    %484 = vmatprep.subr.mxu0 0.0
    %485 = vmatpush2.msra.mxu0 0.0
    %486 = vmatprep.subr.mxu0 0.0
    %487 = vmatpush2.msra.mxu0 0.0
    %488 = vmatprep.subr.mxu0 0.0
    %489 = vmatpush2.msra.mxu0 0.0
    %490 = vmatprep.subr.mxu0 0.0
    %491 = vmatpush2.msra.mxu0 0.0
    %492 = vmatprep.subr.mxu0 0.0
    %493 = vmatpush2.msra.mxu0 0.0
    %494 = vmatprep.subr.mxu0 0.0
    %495 = vmatpush2.msra.mxu0 0.0
    %496 = vmatprep.subr.mxu0 0.0
    %497 = vmatpush2.msra.mxu0 0.0
    %498 = vmatprep.subr.mxu0 0.0
    %499 = vmatpush2.msra.mxu0 0.0
    %500 = vmatprep.subr.mxu0 0.0
    %501 = vmatpush2.msra.mxu0 0.0
    %502 = vmatprep.subr.mxu0 0.0
    %503 = vmatpush2.msra.mxu0 0.0
    %504 = vmatprep.subr.mxu0 0.0
    %505 = vmatpush2.msra.mxu0 0.0
    %506 = vmatprep.mubr.f32.mxu0 0.0
    %507 = vmatmul.mubr.f32.gmra.mxu0 %v441
    %v508 = vpop.f32.mrf.mxu0
    %v509 = vadd.f32 0.0, %v508
    %v510 = vpop.f32.mrf.mxu0
    %511 = vdwg.mxu0
    %v512 = vadd.f32 %v213, %v509
    %v513 = vtanh.pop %v512
    %514 = vmatprep.subr.mxu0 0.0
    %515 = vmatpush1.msra.mxu0 %v45
    %516 = vmatprep.subr.mxu0 0.0
    %517 = vmatpush1.msra.mxu0 %v44
    %518 = vmatprep.subr.mxu0 0.0
    %519 = vmatpush1.msra.mxu0 %v43
    %520 = vmatprep.subr.mxu0 0.0
    %521 = vmatpush1.msra.mxu0 %v42
    %522 = vmatprep.subr.mxu0 0.0
    %523 = vmatpush1.msra.mxu0 %v41
    %524 = vmatprep.subr.mxu0 0.0
    %525 = vmatpush1.msra.mxu0 %v40
    %526 = vmatprep.subr.mxu0 0.0
    %527 = vmatpush1.msra.mxu0 %v39
    %528 = vmatprep.subr.mxu0 0.0
    %529 = vmatpush1.msra.mxu0 %v38
    %530 = vmatprep.subr.mxu0 0.0
    %531 = vmatpush1.msra.mxu0 %v37
    %532 = vmatprep.subr.mxu0 0.0
    %533 = vmatpush1.msra.mxu0 %v36
    %534 = vmatprep.subr.mxu0 0.0
    %535 = vmatpush1.msra.mxu0 %v35
    %536 = vmatprep.subr.mxu0 0.0
    %537 = vmatpush1.msra.mxu0 %v34
    %538 = vmatprep.subr.mxu0 0.0
    %539 = vmatpush1.msra.mxu0 %v33
    %540 = vmatprep.subr.mxu0 0.0
    %541 = vmatpush1.msra.mxu0 %v32
    %542 = vmatprep.subr.mxu0 0.0
    %543 = vmatpush1.msra.mxu0 %v31
    %544 = vmatprep.subr.mxu0 0.0
    %545 = vmatpush1.msra.mxu0 %v30
    %546 = vmatprep.subr.mxu0 0.0
    %547 = vmatpush2.msra.mxu0 0.0
    %548 = vmatprep.subr.mxu0 0.0
    %549 = vmatpush2.msra.mxu0 0.0
    %550 = vmatprep.subr.mxu0 0.0
    %551 = vmatpush2.msra.mxu0 0.0
    %552 = vmatprep.subr.mxu0 0.0
    %553 = vmatpush2.msra.mxu0 0.0
    %554 = vmatprep.subr.mxu0 0.0
    %555 = vmatpush2.msra.mxu0 0.0
    %556 = vmatprep.subr.mxu0 0.0
    %557 = vmatpush2.msra.mxu0 0.0
    %558 = vmatprep.subr.mxu0 0.0
    %559 = vmatpush2.msra.mxu0 0.0
    %560 = vmatprep.subr.mxu0 0.0
    %561 = vmatpush2.msra.mxu0 0.0
    %562 = vmatprep.subr.mxu0 0.0
    %563 = vmatpush2.msra.mxu0 0.0
    %564 = vmatprep.subr.mxu0 0.0
    %565 = vmatpush2.msra.mxu0 0.0
    %566 = vmatprep.subr.mxu0 0.0
    %567 = vmatpush2.msra.mxu0 0.0
    %568 = vmatprep.subr.mxu0 0.0
    %569 = vmatpush2.msra.mxu0 0.0
    %570 = vmatprep.subr.mxu0 0.0
    %571 = vmatpush2.msra.mxu0 0.0
    %572 = vmatprep.subr.mxu0 0.0
    %573 = vmatpush2.msra.mxu0 0.0
    %574 = vmatprep.subr.mxu0 0.0
    %575 = vmatpush2.msra.mxu0 0.0
    %576 = vmatprep.subr.mxu0 0.0
    %577 = vmatpush2.msra.mxu0 0.0
    %578 = vmatprep.mubr.f32.mxu0 0.0
    %579 = vmatmul.mubr.f32.gmra.mxu0 %v513
    %v580 = vpop.f32.mrf.mxu0
    %v581 = vadd.f32 0.0, %v580
    %v582 = vpop.f32.mrf.mxu0
    %583 = vdwg.mxu0
    %v584 = vadd.f32 %v218, %v581
    %v585 = vtanh.pop %v584
    %586 = vmatprep.subr.mxu0 0.0
    %587 = vmatpush1.msra.mxu0 %v45
    %588 = vmatprep.subr.mxu0 0.0
    %589 = vmatpush1.msra.mxu0 %v44
    %590 = vmatprep.subr.mxu0 0.0
    %591 = vmatpush1.msra.mxu0 %v43
    %592 = vmatprep.subr.mxu0 0.0
    %593 = vmatpush1.msra.mxu0 %v42
    %594 = vmatprep.subr.mxu0 0.0
    %595 = vmatpush1.msra.mxu0 %v41
    %596 = vmatprep.subr.mxu0 0.0
    %597 = vmatpush1.msra.mxu0 %v40
    %598 = vmatprep.subr.mxu0 0.0
    %599 = vmatpush1.msra.mxu0 %v39
    %600 = vmatprep.subr.mxu0 0.0
    %601 = vmatpush1.msra.mxu0 %v38
    %602 = vmatprep.subr.mxu0 0.0
    %603 = vmatpush1.msra.mxu0 %v37
    %604 = vmatprep.subr.mxu0 0.0
    %605 = vmatpush1.msra.mxu0 %v36
    %606 = vmatprep.subr.mxu0 0.0
    %607 = vmatpush1.msra.mxu0 %v35
    %608 = vmatprep.subr.mxu0 0.0
    %609 = vmatpush1.msra.mxu0 %v34
    %610 = vmatprep.subr.mxu0 0.0
    %611 = vmatpush1.msra.mxu0 %v33
    %612 = vmatprep.subr.mxu0 0.0
    %613 = vmatpush1.msra.mxu0 %v32
    %614 = vmatprep.subr.mxu0 0.0
    %615 = vmatpush1.msra.mxu0 %v31
    %616 = vmatprep.subr.mxu0 0.0
    %617 = vmatpush1.msra.mxu0 %v30
    %618 = vmatprep.subr.mxu0 0.0
    %619 = vmatpush2.msra.mxu0 0.0
    %620 = vmatprep.subr.mxu0 0.0
    %621 = vmatpush2.msra.mxu0 0.0
    %622 = vmatprep.subr.mxu0 0.0
    %623 = vmatpush2.msra.mxu0 0.0
    %624 = vmatprep.subr.mxu0 0.0
    %625 = vmatpush2.msra.mxu0 0.0
    %626 = vmatprep.subr.mxu0 0.0
    %627 = vmatpush2.msra.mxu0 0.0
    %628 = vmatprep.subr.mxu0 0.0
    %629 = vmatpush2.msra.mxu0 0.0
    %630 = vmatprep.subr.mxu0 0.0
    %631 = vmatpush2.msra.mxu0 0.0
    %632 = vmatprep.subr.mxu0 0.0
    %633 = vmatpush2.msra.mxu0 0.0
    %634 = vmatprep.subr.mxu0 0.0
    %635 = vmatpush2.msra.mxu0 0.0
    %636 = vmatprep.subr.mxu0 0.0
    %637 = vmatpush2.msra.mxu0 0.0
    %638 = vmatprep.subr.mxu0 0.0
    %639 = vmatpush2.msra.mxu0 0.0
    %640 = vmatprep.subr.mxu0 0.0
    %641 = vmatpush2.msra.mxu0 0.0
    %642 = vmatprep.subr.mxu0 0.0
    %643 = vmatpush2.msra.mxu0 0.0
    %644 = vmatprep.subr.mxu0 0.0
    %645 = vmatpush2.msra.mxu0 0.0
    %646 = vmatprep.subr.mxu0 0.0
    %647 = vmatpush2.msra.mxu0 0.0
    %648 = vmatprep.subr.mxu0 0.0
    %649 = vmatpush2.msra.mxu0 0.0
    %650 = vmatprep.mubr.f32.mxu0 0.0
    %651 = vmatmul.mubr.f32.gmra.mxu0 %v585
    %v652 = vpop.f32.mrf.mxu0
    %v653 = vadd.f32 0.0, %v652
    %v654 = vpop.f32.mrf.mxu0
    %655 = vdwg.mxu0
    %v656 = vadd.f32 %v223, %v653
    %v657 = vtanh.pop %v656
    %v658 = vlaneseq
    %v659 = vshrl.u32 %v658, 7
    %v660 = vsub.s32 0, %v659
    %v661 = vrot.slane %v63, %v660
    %662 = vmatprep.subr.mxu0 0.0
    %663 = vmatpush1.msra.mxu0 %v61
    %664 = vmatprep.subr.mxu0 0.0
    %665 = vmatpush1.msra.mxu0 %v60
    %666 = vmatprep.subr.mxu0 0.0
    %667 = vmatpush1.msra.mxu0 %v59
    %668 = vmatprep.subr.mxu0 0.0
    %669 = vmatpush1.msra.mxu0 %v58
    %670 = vmatprep.subr.mxu0 0.0
    %671 = vmatpush1.msra.mxu0 %v57
    %672 = vmatprep.subr.mxu0 0.0
    %673 = vmatpush1.msra.mxu0 %v56
    %674 = vmatprep.subr.mxu0 0.0
    %675 = vmatpush1.msra.mxu0 %v55
    %676 = vmatprep.subr.mxu0 0.0
    %677 = vmatpush1.msra.mxu0 %v54
    %678 = vmatprep.subr.mxu0 0.0
    %679 = vmatpush1.msra.mxu0 %v53
    %680 = vmatprep.subr.mxu0 0.0
    %681 = vmatpush1.msra.mxu0 %v52
    %682 = vmatprep.subr.mxu0 0.0
    %683 = vmatpush1.msra.mxu0 %v51
    %684 = vmatprep.subr.mxu0 0.0
    %685 = vmatpush1.msra.mxu0 %v50
    %686 = vmatprep.subr.mxu0 0.0
    %687 = vmatpush1.msra.mxu0 %v49
    %688 = vmatprep.subr.mxu0 0.0
    %689 = vmatpush1.msra.mxu0 %v48
    %690 = vmatprep.subr.mxu0 0.0
    %691 = vmatpush1.msra.mxu0 %v47
    %692 = vmatprep.subr.mxu0 0.0
    %693 = vmatpush1.msra.mxu0 %v46
    %694 = vmatprep.subr.mxu0 0.0
    %695 = vmatpush2.msra.mxu0 0.0
    %696 = vmatprep.subr.mxu0 0.0
    %697 = vmatpush2.msra.mxu0 0.0
    %698 = vmatprep.subr.mxu0 0.0
    %699 = vmatpush2.msra.mxu0 0.0
    %700 = vmatprep.subr.mxu0 0.0
    %701 = vmatpush2.msra.mxu0 0.0
    %702 = vmatprep.subr.mxu0 0.0
    %703 = vmatpush2.msra.mxu0 0.0
    %704 = vmatprep.subr.mxu0 0.0
    %705 = vmatpush2.msra.mxu0 0.0
    %706 = vmatprep.subr.mxu0 0.0
    %707 = vmatpush2.msra.mxu0 0.0
    %708 = vmatprep.subr.mxu0 0.0
    %709 = vmatpush2.msra.mxu0 0.0
    %710 = vmatprep.subr.mxu0 0.0
    %711 = vmatpush2.msra.mxu0 0.0
    %712 = vmatprep.subr.mxu0 0.0
    %713 = vmatpush2.msra.mxu0 0.0
    %714 = vmatprep.subr.mxu0 0.0
    %715 = vmatpush2.msra.mxu0 0.0
    %716 = vmatprep.subr.mxu0 0.0
    %717 = vmatpush2.msra.mxu0 0.0
    %718 = vmatprep.subr.mxu0 0.0
    %719 = vmatpush2.msra.mxu0 0.0
    %720 = vmatprep.subr.mxu0 0.0
    %721 = vmatpush2.msra.mxu0 0.0
    %722 = vmatprep.subr.mxu0 0.0
    %723 = vmatpush2.msra.mxu0 0.0
    %724 = vmatprep.subr.mxu0 0.0
    %725 = vmatpush2.msra.mxu0 0.0
    %726 = vmatprep.mubr.f32.mxu0 0.0
    %727 = vmatmul.mubr.f32.gmra.mxu0 %v657
    %v728 = vpop.f32.mrf.mxu0
    %v729 = vadd.f32 %v661, %v728
    %v730 = vpop.f32.mrf.mxu0
    %731 = vdwg.mxu0
    %732 = vst [vmem:[#allocation5] sm:$0xff] %v729
    // Predicated region
    $region14: #{tpu_custom_call.1} parent=1 // pred_check
      _
    $region15: #{tpu_custom_call.1} parent=1 // pred_check_branch
      %734 = sbr.rel (0) target = $region17
    $region16: #{tpu_custom_call.1} parent=1 // pred_region
      %s736 = ssub.s32 128, 128
      %737 = vsyncadd [#allocation4], %s736
      %s739 = sshll.u32 [#allocation5], 4
      %s740 = int_to_ptr.vmem [resolvable:$true] %s739
      %742 = dma.vmem_to_hbm [thread:$0]  %s740, 128, %s2, [#allocation4]
    $region17: #{tpu_custom_call.1} parent=1 // pred_fallthru
      _
    // Predicated region
    $region18: #{tpu_custom_call.1} parent=1 // pred_check
      _
    $region19: #{tpu_custom_call.1} parent=1 // pred_check_branch
      %744 = sbr.rel (0) target = $region21
    $region20: #{tpu_custom_call.1} parent=1 // pred_region
      %745 = dma.done [#allocation4], 128
    $region21: #{tpu_custom_call.1} parent=1 // pred_fallthru
      _
    %746 = vsyncpa [#allocation3], 1
    %747 = vsyncpa [#allocation4], 1

</llo_original>
